<compile_context>
chip_gen: v7x
topology: tpu7x:2x2x1
jax: 0.10.0
libtpu: 0.0.40
codegen_flags: <defaults>
</compile_context>

<pallas_src>
import jax
import jax.numpy as jnp
from jax import lax
from jax.experimental import pallas as pl
from jax.experimental.pallas import tpu as pltpu

_LANE = 128


def _upsample_matmul_kernel(x_ref, w_ref, b_ref, o_ref):
    # x_ref: (1, Cin, tm)   w_ref: (Nout, Cin)   b_ref: (Nout, 1)
    # o_ref: (1, Nout, tm)
    res = jnp.dot(w_ref[...], x_ref[0], preferred_element_type=jnp.float32)
    res = res + b_ref[...]                       # fused bias (broadcast over lanes)
    o_ref[...] = res[None].astype(o_ref.dtype)


def conv_transpose3d_pallas(x, weight, bias, stride):
    """Equivalent of nn.ConvTranspose3d(in, out, kernel, stride)(x).

    x:      (N, Cin, D, H, W)        float32
    weight: (Cin, Cout, Kd, Kh, Kw)  float32  (PyTorch ConvTranspose3d layout)
    bias:   (Cout,)                  float32
    returns (N, Cout, (D-1)*s+Kd, (H-1)*s+Kh, (W-1)*s+Kw)
    """
    N, Cin, D, H, W = x.shape
    Cin_w, Cout, Kd, Kh, Kw = weight.shape
    assert Cin == Cin_w
    s = int(stride)
    Od, Oh, Ow = (D - 1) * s + Kd, (H - 1) * s + Kh, (W - 1) * s + Kw
    Nout = Cout * Kd * Kh * Kw
    M = D * H * W

    # Lane-dense tiling of the spatial axis: tm is a multiple of 128, as big
    # as is useful (memory-bound kernel -> big tiles), capped so blocks stay
    # comfortably inside VMEM on all generations (incl. v7x's 64 MiB).
    tm = min(2048, pl.cdiv(M, _LANE) * _LANE)
    num_m = pl.cdiv(M, tm)
    Mp = num_m * tm

    x3 = x.reshape(N, Cin, M).astype(jnp.float32)        # free reshape, no transpose
    if Mp != M:
        x3 = jnp.pad(x3, ((0, 0), (0, 0), (0, Mp - M)))

    # Weight as (Nout, Cin); row r corresponds to (co, kd, kh, kw).
    w_t = jnp.transpose(weight.reshape(Cin, Nout)).astype(jnp.float32)

    # When stride == kernel there is no overlap: every output pixel gets
    # exactly one contribution, so bias can be fused into the matmul and the
    # scatter collapses to a pixel shuffle.
    no_overlap_shuffle = (s == Kd == Kh == Kw)
    bias_rows = jnp.repeat(bias.astype(jnp.float32), Kd * Kh * Kw).reshape(Nout, 1)
    bias_in = bias_rows if no_overlap_shuffle else jnp.zeros_like(bias_rows)

    cost = pl.CostEstimate(
        flops=2 * N * Mp * Cin * Nout,
        transcendentals=0,
        bytes_accessed=4 * (N * Cin * Mp + Nout * Cin + Nout + N * Nout * Mp),
    )

    y = pl.pallas_call(
        _upsample_matmul_kernel,
        out_shape=jax.ShapeDtypeStruct((N, Nout, Mp), jnp.float32),
        grid_spec=pltpu.PrefetchScalarGridSpec(
            num_scalar_prefetch=0,
            grid=(N, num_m),
            in_specs=[
                pl.BlockSpec((1, Cin, tm), lambda n, i: (n, 0, i)),
                pl.BlockSpec((Nout, Cin), lambda n, i: (0, 0)),
                pl.BlockSpec((Nout, 1), lambda n, i: (0, 0)),
            ],
            out_specs=pl.BlockSpec((1, Nout, tm), lambda n, i: (n, 0, i)),
        ),
        compiler_params=pltpu.CompilerParams(
            dimension_semantics=("parallel", "parallel"),
        ),
        cost_estimate=cost,
    )(x3, w_t, bias_in)

    # y[n, (co,kd,kh,kw), m] = sum_ci x[n,ci,m] * W[ci,co,kd,kh,kw]  (+ bias)
    y = y[:, :, :M].reshape(N, Cout, Kd, Kh, Kw, D, H, W)

    if no_overlap_shuffle:
        # Pure pixel shuffle: out[n,co,d*s+kd,h*s+kh,w*s+kw] = y[n,co,kd,kh,kw,d,h,w]
        out = jnp.transpose(y, (0, 1, 5, 2, 6, 3, 7, 4)).reshape(N, Cout, Od, Oh, Ow)
    else:
        # General fallback (stride != kernel: overlaps or gaps): scatter-add.
        # TODO(synk): could also be folded into out_specs for the gap-only case.
        out = jnp.zeros((N, Cout, Od, Oh, Ow), jnp.float32)
        out = out + bias.reshape(1, Cout, 1, 1, 1).astype(jnp.float32)
        for kd in range(Kd):
            for kh in range(Kh):
                for kw in range(Kw):
                    out = out.at[
                        :, :,
                        kd:kd + (D - 1) * s + 1:s,
                        kh:kh + (H - 1) * s + 1:s,
                        kw:kw + (W - 1) * s + 1:s,
                    ].add(y[:, :, kd, kh, kw])
    return out


def conv_transpose3d_ref(x, weight, bias, stride):
    """Independent reference: transposed conv == conv with lhs dilation and
    a spatially-flipped / IO-swapped kernel."""
    Cin, Cout, Kd, Kh, Kw = weight.shape
    s = int(stride)
    w_flip = weight[:, :, ::-1, ::-1, ::-1]              # flip spatial
    w_oi = jnp.transpose(w_flip, (1, 0, 2, 3, 4))        # (Cout, Cin, Kd, Kh, Kw)
    out = lax.conv_general_dilated(
        x.astype(jnp.float32),
        w_oi.astype(jnp.float32),
        window_strides=(1, 1, 1),
        padding=((Kd - 1, Kd - 1), (Kh - 1, Kh - 1), (Kw - 1, Kw - 1)),
        lhs_dilation=(s, s, s),
        dimension_numbers=("NCDHW", "OIDHW", "NCDHW"),
        precision=lax.Precision.HIGHEST,
    )
    return out + bias.reshape(1, Cout, 1, 1, 1)


if __name__ == "__main__":
    # Small shapes consistent with UpSample(in_dim=4, out_dim=8, kernel=2, stride=2)
    batch, in_dim, out_dim = 2, 4, 8
    kernel, stride = 2, 2
    D = H = W = 4

    key = jax.random.PRNGKey(0)
    kx, kw, kb = jax.random.split(key, 3)
    x = jax.random.normal(kx, (batch, in_dim, D, H, W), jnp.float32)
    weight = 0.1 * jax.random.normal(
        kw, (in_dim, out_dim, kernel, kernel, kernel), jnp.float32
    )
    bias = 0.1 * jax.random.normal(kb, (out_dim,), jnp.float32)

    out = conv_transpose3d_pallas(x, weight, bias, stride)
    out = jax.block_until_ready(out)

    ref = jax.block_until_ready(conv_transpose3d_ref(x, weight, bias, stride))

    assert out.shape == (batch, out_dim, (D - 1) * stride + kernel,
                         (H - 1) * stride + kernel, (W - 1) * stride + kernel)
    max_err = float(jnp.max(jnp.abs(out - ref)))
    assert jnp.allclose(out, ref, atol=2e-2, rtol=2e-2), max_err
    print("KERNEL_OK")
</pallas_src>

<mosaic_0001>
module attributes {stable_mosaic.version = 11 : i64} {
  func.func @_upsample_matmul_kernel(%arg0: i32, %arg1: i32, %arg2: memref<1x4x128xf32, #tpu.memory_space<vmem>>, %arg3: memref<64x4xf32, #tpu.memory_space<vmem>>, %arg4: memref<64x1xf32, #tpu.memory_space<vmem>>, %arg5: memref<1x64x128xf32, #tpu.memory_space<vmem>>) attributes {dimension_semantics = [#tpu.dimension_semantics<parallel>, #tpu.dimension_semantics<parallel>], iteration_bounds = array<i64: 2, 1>, scalar_prefetch = 0 : i64, scratch_operands = 0 : i64, tpu.core_type = #tpu.core_type<tc>, window_params = [{transform_indices = @transform_0, window_bounds = array<i64: 1, 4, 128>}, {pipeline_mode = #tpu.pipeline_mode<synchronous>, transform_indices = @transform_1, window_bounds = array<i64: 64, 4>}, {pipeline_mode = #tpu.pipeline_mode<synchronous>, transform_indices = @transform_2, window_bounds = array<i64: 64, 1>}, {transform_indices = @transform_3, window_bounds = array<i64: 1, 64, 128>}]} {
    %c0 = arith.constant 0 : index
    %c0_0 = arith.constant 0 : index
    %0 = vector.load %arg3[%c0, %c0_0] : memref<64x4xf32, #tpu.memory_space<vmem>>, vector<64x4xf32>
    %c0_1 = arith.constant 0 : index
    %c0_2 = arith.constant 0 : index
    %c0_3 = arith.constant 0 : index
    %1 = vector.load %arg2[%c0_1, %c0_2, %c0_3] : memref<1x4x128xf32, #tpu.memory_space<vmem>>, vector<1x4x128xf32>
    %2 = vector.shape_cast %1 : vector<1x4x128xf32> to vector<4x128xf32>
    %cst = arith.constant dense<0.000000e+00> : vector<64x128xf32>
    %3 = tpu.matmul %0, %2, %cst {dimension_numbers = #tpu.dot_dimension_numbers<[1], [0], [0], [1], [0, 0, 1, 1], [], []>} : vector<64x4xf32>, vector<4x128xf32>, vector<64x128xf32> -> vector<64x128xf32>
    %c0_4 = arith.constant 0 : index
    %c0_5 = arith.constant 0 : index
    %4 = vector.load %arg4[%c0_4, %c0_5] : memref<64x1xf32, #tpu.memory_space<vmem>>, vector<64x1xf32>
    %5 = vector.broadcast %4 : vector<64x1xf32> to vector<64x128xf32>
    %6 = arith.addf %3, %5 : vector<64x128xf32>
    %7 = vector.shape_cast %6 : vector<64x128xf32> to vector<1x64x128xf32>
    %c0_6 = arith.constant 0 : index
    %c0_7 = arith.constant 0 : index
    %c0_8 = arith.constant 0 : index
    %8 = vector.load %arg5[%c0_6, %c0_7, %c0_8] : memref<1x64x128xf32, #tpu.memory_space<vmem>>, vector<1x64x128xf32>
    tpu.vector_store %arg5[%c0_6, %c0_7, %c0_8], %7 {strides = array<i32>} : memref<1x64x128xf32, #tpu.memory_space<vmem>>, vector<1x64x128xf32>,
    return
  }
  func.func @transform_0(%arg0: i32, %arg1: i32) -> (i32, i32, i32) {
    %c0_i32 = arith.constant 0 : i32
    %c0_i32_0 = arith.constant 0 : i32
    return %arg0, %c0_i32, %arg1 : i32, i32, i32
  }
  func.func @transform_1(%arg0: i32, %arg1: i32) -> (i32, i32) {
    %c0_i32 = arith.constant 0 : i32
    %c0_i32_0 = arith.constant 0 : i32
    %c0_i32_1 = arith.constant 0 : i32
    return %c0_i32, %c0_i32_0 : i32, i32
  }
  func.func @transform_2(%arg0: i32, %arg1: i32) -> (i32, i32) {
    %c0_i32 = arith.constant 0 : i32
    %c0_i32_0 = arith.constant 0 : i32
    %c0_i32_1 = arith.constant 0 : i32
    return %c0_i32, %c0_i32_0 : i32, i32
  }
  func.func @transform_3(%arg0: i32, %arg1: i32) -> (i32, i32, i32) {
    %c0_i32 = arith.constant 0 : i32
    %c0_i32_0 = arith.constant 0 : i32
    return %arg0, %c0_i32, %arg1 : i32, i32, i32
  }
}

</mosaic_0001>

<llo_original>
// kernel: tpu_custom_call.1
$region0: #{tpu_custom_call.1}
  #allocation0 [shape = 'u32[]', space=smem, size = 0x4, offset = 0x4, fixed_abs, tag = 'smem constant byte address 0x4 - core index']
  #allocation1 [shape = 'u32[144,128]{1,0:T(1,128)}', space=vmem, size = 0x12000, scoped, tag = 'internal scratch']
  %s0 = inlined_call_operand.vmem [shape: f32[2,4,128], index: 0, kind: input, shape index: {}]
  %s1 = inlined_call_operand.vmem [shape: f32[64,4], index: 1, kind: input, shape index: {}]
  %s2 = inlined_call_operand.vmem [shape: f32[64,1], index: 2, kind: input, shape index: {}]
  %s3 = inlined_call_operand.hbm [shape: f32[2,64,128], index: 3, kind: output, shape index: {}]
  %s4 = sld [smem:[#allocation0]]
  $region45: #{tpu_custom_call.1} parent=0
    _
  %s6 = ssub.s32 1, %s4
  %s7 = scalar_select 0, %s6, %s4
  $region1: #{tpu_custom_call.1} parent=0
    #allocation2 [shape = 'u8[65536]{0}', space=vmem, size = 0x10000, scoped, tag = 'output window, operand 0']
    #allocation3 [shape = 's32[2]{0}', space=sflag, size = 0x8, scoped, tag = 'scoped memory for tpu_custom_call.1']
    %8 = vsyncpa [#allocation3], 0
    %s9 = scalar_lea.sflag [#allocation3], 1
    %10 = vsyncpa %s9, 0
    loop: start=0, step=1, limit=4
    $region2: #{tpu_custom_call.1} parent=1 // loop_pre_header
      _
    $region3: #{tpu_custom_call.1} parent=1 // loop_header
      %s12 = sphi 0, %s16
      %p13 = scmp.ge.s32.totalorder %s12, 4
      %s19 = sphi 0, %s31
      %s20 = sphi 0, %s27
      %s21 = sphi 0, %s19
      %s22 = sphi 0, %s20
      %s23 = sphi 0, %s21
      %s24 = sphi 0, %s22
      %s36 = sphi 0, %s38
      %s39 = sphi 0, %s36
      %s40 = sphi 0, %s39
      %s56 = sphi 0, %s40
      %s60 = sphi 0, %s60
      %s62 = sphi 0, %s60
      %s63 = sphi 0, %s62
      %s77 = sphi 0, %s63
      %s81 = sphi 0, %s81
      %s83 = sphi 0, %s81
      %s84 = sphi 0, %s83
      %s98 = sphi 0, %s84
      %s106 = sphi 0, %s108
      %s109 = sphi 0, %s106
      %s110 = sphi 0, %s109
      %s126 = sphi 0, %s110
    $region4: #{tpu_custom_call.1} parent=1 // loop_header_branch
      %15 = sbr.rel (%p13) target = $region8
    $region5: #{tpu_custom_call.1} parent=1 // loop_body
      %s17 = ssub.s32 %s12, 1
      %s18 = ssub.s32 %s12, 2
      %s25 = sadd.s32 1, %s20
      %p26 = scmp.ge.s32.totalorder %s25, 1
      %s27 = scalar_select %p26, 0, %s25
      %s28 = sadd.s32 1, %s19
      %s29 = scalar_select %p26, %s28, %s19
      %p30 = scmp.ge.s32.totalorder %s29, 2
      %s31 = scalar_select %p30, 0, %s29
      %s32 = ssub.s32 %s19, %s31
      %s33 = ssub.s32 %s20, %s27
      %s34 = sor.u32 %s32, %s33
      %p35 = scmp.eq.s32.totalorder %s34, 0
      %s37 = sadd.s32 %s36, 1
      %s38 = scalar_select %p35, %s36, %s37
      %p41 = pneg %p35
      %p42 = scmp.eq.s32.totalorder %s12, 1
      %p43 = por %p41, %p42
      %p44 = scmp.ne.s32.totalorder %s36, %s39
      %p45 = scmp.eq.s32.totalorder %s12, 0
      %p46 = por %p44, %p45
      %p47 = scmp.ne.s32.totalorder %s36, %s39
      %p48 = scmp.eq.s32.totalorder %s17, 1
      %p49 = por %p47, %p48
      %p50 = scmp.ne.s32.totalorder %s39, %s40
      %p51 = scmp.eq.s32.totalorder %s17, 0
      %p52 = por %p50, %p51
      %p53 = scmp.ne.s32.totalorder %s39, %s40
      %p54 = scmp.eq.s32.totalorder %s18, 1
      %p55 = por %p53, %p54
      %p57 = scmp.ne.s32.totalorder %s40, %s56
      %p58 = scmp.eq.s32.totalorder %s18, 0
      %p59 = por %p57, %p58
      %s61 = sadd.s32 %s60, 1
      %p64 = scmp.eq.s32.totalorder %s12, 1
      %p65 = scmp.ne.s32.totalorder %s60, %s62
      %p66 = scmp.eq.s32.totalorder %s12, 0
      %p67 = por %p65, %p66
      %p68 = scmp.ne.s32.totalorder %s60, %s62
      %p69 = scmp.eq.s32.totalorder %s17, 1
      %p70 = por %p68, %p69
      %p71 = scmp.ne.s32.totalorder %s62, %s63
      %p72 = scmp.eq.s32.totalorder %s17, 0
      %p73 = por %p71, %p72
      %p74 = scmp.ne.s32.totalorder %s62, %s63
      %p75 = scmp.eq.s32.totalorder %s18, 1
      %p76 = por %p74, %p75
      %p78 = scmp.ne.s32.totalorder %s63, %s77
      %p79 = scmp.eq.s32.totalorder %s18, 0
      %p80 = por %p78, %p79
      %s82 = sadd.s32 %s81, 1
      %p85 = scmp.eq.s32.totalorder %s12, 1
      %p86 = scmp.ne.s32.totalorder %s81, %s83
      %p87 = scmp.eq.s32.totalorder %s12, 0
      %p88 = por %p86, %p87
      %p89 = scmp.ne.s32.totalorder %s81, %s83
      %p90 = scmp.eq.s32.totalorder %s17, 1
      %p91 = por %p89, %p90
      %p92 = scmp.ne.s32.totalorder %s83, %s84
      %p93 = scmp.eq.s32.totalorder %s17, 0
      %p94 = por %p92, %p93
      %p95 = scmp.ne.s32.totalorder %s83, %s84
      %p96 = scmp.eq.s32.totalorder %s18, 1
      %p97 = por %p95, %p96
      %p99 = scmp.ne.s32.totalorder %s84, %s98
      %p100 = scmp.eq.s32.totalorder %s18, 0
      %p101 = por %p99, %p100
      %s102 = ssub.s32 %s19, %s31
      %s103 = ssub.s32 %s20, %s27
      %s104 = sor.u32 %s102, %s103
      %p105 = scmp.eq.s32.totalorder %s104, 0
      %s107 = sadd.s32 %s106, 1
      %s108 = scalar_select %p105, %s106, %s107
      %p111 = pneg %p105
      %p112 = scmp.eq.s32.totalorder %s12, 1
      %p113 = por %p111, %p112
      %p114 = scmp.ne.s32.totalorder %s106, %s109
      %p115 = scmp.eq.s32.totalorder %s12, 0
      %p116 = por %p114, %p115
      %p117 = scmp.ne.s32.totalorder %s106, %s109
      %p118 = scmp.eq.s32.totalorder %s17, 1
      %p119 = por %p117, %p118
      %p120 = scmp.ne.s32.totalorder %s109, %s110
      %p121 = scmp.eq.s32.totalorder %s17, 0
      %p122 = por %p120, %p121
      %p123 = scmp.ne.s32.totalorder %s109, %s110
      %p124 = scmp.eq.s32.totalorder %s18, 1
      %p125 = por %p123, %p124
      %p127 = scmp.ne.s32.totalorder %s110, %s126
      %p128 = scmp.eq.s32.totalorder %s18, 0
      %p129 = por %p127, %p128
      %p130 = scmp.le.s32.totalorder 1, %s12
      %p131 = scmp.lt.s32.totalorder %s12, 3
      %p132 = pnand %p130, %p131
      %p133 = pneg %p132
      // Predicated region
      $region9: #{tpu_custom_call.1} parent=5 // pred_check
        _
      $region10: #{tpu_custom_call.1} parent=5 // pred_check_branch
        %135 = sbr.rel (%p132) target = $region12
      $region11: #{tpu_custom_call.1} parent=5 // pred_region
        %s136 = ssub.s32 %s12, 1
        // Predicated region
        $region13: #{tpu_custom_call.1} parent=11 // pred_check
          %p137 = pneg %p73
        $region14: #{tpu_custom_call.1} parent=11 // pred_check_branch
          %139 = sbr.rel (%p137) target = $region16
        $region15: #{tpu_custom_call.1} parent=11 // pred_region
          _
        $region16: #{tpu_custom_call.1} parent=11 // pred_fallthru
          _
        // Predicated region
        $region17: #{tpu_custom_call.1} parent=11 // pred_check
          %p140 = pneg %p94
        $region18: #{tpu_custom_call.1} parent=11 // pred_check_branch
          %142 = sbr.rel (%p140) target = $region20
        $region19: #{tpu_custom_call.1} parent=11 // pred_region
          _
        $region20: #{tpu_custom_call.1} parent=11 // pred_fallthru
          _
      $region12: #{tpu_custom_call.1} parent=5 // pred_fallthru
        _
      %p143 = scmp.lt.s32.totalorder %s12, 2
      // Predicated region
      $region21: #{tpu_custom_call.1} parent=5 // pred_check
        %p144 = pneg %p143
      $region22: #{tpu_custom_call.1} parent=5 // pred_check_branch
        %146 = sbr.rel (%p144) target = $region24
      $region23: #{tpu_custom_call.1} parent=5 // pred_region
        // Predicated region
        $region25: #{tpu_custom_call.1} parent=23 // pred_check
          %p147 = pneg %p46
        $region26: #{tpu_custom_call.1} parent=23 // pred_check_branch
          %149 = sbr.rel (%p147) target = $region28
        $region27: #{tpu_custom_call.1} parent=23 // pred_region
          %p150 = scmp.lt.s32.totalorder %s19, 1
          %s151 = scalar_select %p150, %s19, 1
          %p152 = scmp.lt.s32.totalorder %s20, 0
          %s153 = scalar_select %p152, %s20, 0
          %s154 = sadd.s32 %s153, %s151
          %s155 = smul.addr %s154, 4
          %s156 = scalar_lea.vmem %s0, %s155
        $region28: #{tpu_custom_call.1} parent=23 // pred_fallthru
          _
      $region24: #{tpu_custom_call.1} parent=5 // pred_fallthru
        _
      %p157 = scmp.le.s32.totalorder 1, %s12
      %p158 = scmp.lt.s32.totalorder %s12, 3
      %p159 = pnand %p157, %p158
      %p160 = pneg %p159
      // Predicated region
      $region29: #{tpu_custom_call.1} parent=5 // pred_check
        _
      $region30: #{tpu_custom_call.1} parent=5 // pred_check_branch
        %162 = sbr.rel (%p159) target = $region32
      $region31: #{tpu_custom_call.1} parent=5 // pred_region
        %s163 = ssub.s32 %s12, 1
        %p164 = scmp.lt.s32.totalorder %s21, 1
        %s165 = scalar_select %p164, %s21, 1
        %p166 = scmp.lt.s32.totalorder %s22, 0
        %s167 = scalar_select %p166, %s22, 0
        %s168 = sadd.s32 %s167, %s165
        %s169 = smul.addr %s168, 4
        %s170 = scalar_lea.vmem %s0, %s169
        %p171 = pneg %p52
        %p172 = pneg %p49
        %p173 = pneg %p73
        %p174 = pneg %p70
        %p175 = pneg %p94
        %p176 = pneg %p91
        %p177 = pneg %p122
        %p178 = pneg %p119
        %s179 = sand.u32 %s109, 1
        %s180 = scalar_lea.sflag [#allocation3], %s179
        %s181 = sand.u32 %s109, 1
        %s182 = smul.addr %s181, 64
        %s183 = scalar_lea.vmem [#allocation2], %s182
        %p184 = scmp.lt.s32.totalorder %s21, 1
        %s185 = scalar_select %p184, %s21, 1
        %p186 = scmp.lt.s32.totalorder %s22, 0
        %s187 = scalar_select %p186, %s22, 0
        %s188 = sadd.s32 %s187, %s185
        %s189 = smul.addr %s188, 4
        %s190 = scalar_lea.vmem %s0, %s189
        %v191 = vld [vmem:[%s1] sm:$0xff]
        %v192 = vld [vmem:[%s1 + $0x8] sm:$0xff]
        %v193 = vld [vmem:[%s1 + $0x10] sm:$0xff]
        %v194 = vld [vmem:[%s1 + $0x18] sm:$0xff]
        %v195 = vld [vmem:[%s1 + $0x20] sm:$0xff]
        %v196 = vld [vmem:[%s1 + $0x28] sm:$0xff]
        %v197 = vld [vmem:[%s1 + $0x30] sm:$0xff]
        %v198 = vld [vmem:[%s1 + $0x38] sm:$0xff]
        %v199 = vld [vmem:[%s190] sm:$0xf]
        %v200 = vld [vmem:[%s2] sm:$0xff]
        %v201 = vld [vmem:[%s2 + $0x8] sm:$0xff]
        %v202 = vld [vmem:[%s2 + $0x10] sm:$0xff]
        %v203 = vld [vmem:[%s2 + $0x18] sm:$0xff]
        %v204 = vld [vmem:[%s2 + $0x20] sm:$0xff]
        %v205 = vld [vmem:[%s2 + $0x28] sm:$0xff]
        %v206 = vld [vmem:[%s2 + $0x30] sm:$0xff]
        %v207 = vld [vmem:[%s2 + $0x38] sm:$0xff]
        %209 = vset.pattern.permute.xlu0 0
        %210 = vperm.xlu0 %209, %v200
        %v211 = vpop.permute.xlu0 %210
        %214 = vset.pattern.permute.xlu0 0
        %215 = vperm.xlu0 %214, %v201
        %v216 = vpop.permute.xlu0 %215
        %219 = vset.pattern.permute.xlu0 0
        %220 = vperm.xlu0 %219, %v202
        %v221 = vpop.permute.xlu0 %220
        %224 = vset.pattern.permute.xlu0 0
        %225 = vperm.xlu0 %224, %v203
        %v226 = vpop.permute.xlu0 %225
        %229 = vset.pattern.permute.xlu0 0
        %230 = vperm.xlu0 %229, %v204
        %v231 = vpop.permute.xlu0 %230
        %234 = vset.pattern.permute.xlu0 0
        %235 = vperm.xlu0 %234, %v205
        %v236 = vpop.permute.xlu0 %235
        %239 = vset.pattern.permute.xlu0 0
        %240 = vperm.xlu0 %239, %v206
        %v241 = vpop.permute.xlu0 %240
        %244 = vset.pattern.permute.xlu0 0
        %245 = vperm.xlu0 %244, %v207
        %v246 = vpop.permute.xlu0 %245
        %vm248 = vcmask 31744
        %v250 = vsel %vm248, %v191, 0
        %v253 = vsel %vm248, %v192, 0
        %v256 = vsel %vm248, %v193, 0
        %v259 = vsel %vm248, %v194, 0
        %v262 = vsel %vm248, %v195, 0
        %v265 = vsel %vm248, %v196, 0
        %v268 = vsel %vm248, %v197, 0
        %v271 = vsel %vm248, %v198, 0
        %vm273 = vcmask 1043456
        %v275 = vsel %vm273, %v199, 0
        %277 = vmatprep.subr.mxu0 0.0
        %278 = vmatpush1.msra.mxu0 %v275
        %279 = vmatprep.subr.mxu0 0.0
        %280 = vmatpush1.msra.mxu0 0.0
        %281 = vmatprep.subr.mxu0 0.0
        %282 = vmatpush1.msra.mxu0 0.0
        %283 = vmatprep.subr.mxu0 0.0
        %284 = vmatpush1.msra.mxu0 0.0
        %285 = vmatprep.subr.mxu0 0.0
        %286 = vmatpush1.msra.mxu0 0.0
        %287 = vmatprep.subr.mxu0 0.0
        %288 = vmatpush1.msra.mxu0 0.0
        %289 = vmatprep.subr.mxu0 0.0
        %290 = vmatpush1.msra.mxu0 0.0
        %291 = vmatprep.subr.mxu0 0.0
        %292 = vmatpush1.msra.mxu0 0.0
        %293 = vmatprep.subr.mxu0 0.0
        %294 = vmatpush1.msra.mxu0 0.0
        %295 = vmatprep.subr.mxu0 0.0
        %296 = vmatpush1.msra.mxu0 0.0
        %297 = vmatprep.subr.mxu0 0.0
        %298 = vmatpush1.msra.mxu0 0.0
        %299 = vmatprep.subr.mxu0 0.0
        %300 = vmatpush1.msra.mxu0 0.0
        %301 = vmatprep.subr.mxu0 0.0
        %302 = vmatpush1.msra.mxu0 0.0
        %303 = vmatprep.subr.mxu0 0.0
        %304 = vmatpush1.msra.mxu0 0.0
        %305 = vmatprep.subr.mxu0 0.0
        %306 = vmatpush1.msra.mxu0 0.0
        %307 = vmatprep.subr.mxu0 0.0
        %308 = vmatpush1.msra.mxu0 0.0
        %309 = vmatprep.subr.mxu0 0.0
        %310 = vmatpush1.msra.mxu0 0.0
        %311 = vmatprep.subr.mxu0 0.0
        %312 = vmatpush1.msra.mxu0 0.0
        %313 = vmatprep.subr.mxu0 0.0
        %314 = vmatpush1.msra.mxu0 0.0
        %315 = vmatprep.subr.mxu0 0.0
        %316 = vmatpush1.msra.mxu0 0.0
        %317 = vmatprep.subr.mxu0 0.0
        %318 = vmatpush1.msra.mxu0 0.0
        %319 = vmatprep.subr.mxu0 0.0
        %320 = vmatpush1.msra.mxu0 0.0
        %321 = vmatprep.subr.mxu0 0.0
        %322 = vmatpush1.msra.mxu0 0.0
        %323 = vmatprep.subr.mxu0 0.0
        %324 = vmatpush1.msra.mxu0 0.0
        %325 = vmatprep.subr.mxu0 0.0
        %326 = vmatpush1.msra.mxu0 0.0
        %327 = vmatprep.subr.mxu0 0.0
        %328 = vmatpush1.msra.mxu0 0.0
        %329 = vmatprep.subr.mxu0 0.0
        %330 = vmatpush1.msra.mxu0 0.0
        %331 = vmatprep.subr.mxu0 0.0
        %332 = vmatpush1.msra.mxu0 0.0
        %333 = vmatprep.subr.mxu0 0.0
        %334 = vmatpush1.msra.mxu0 0.0
        %335 = vmatprep.subr.mxu0 0.0
        %336 = vmatpush1.msra.mxu0 0.0
        %337 = vmatprep.subr.mxu0 0.0
        %338 = vmatpush1.msra.mxu0 0.0
        %339 = vmatprep.subr.mxu0 0.0
        %340 = vmatpush1.msra.mxu0 0.0
        %341 = vmatprep.mubr.f32.mxu0 0.0
        %342 = vmatmul.mubr.f32.gmra.mrb[0].mxu0 %v250
        %v343 = vpop.f32.mrb[0].mxu0
        %v344 = vadd.f32 %v211, %v343
        %v345 = vpop.f32.mrb[0].mxu0
        %346 = vmatprep.mubr.f32.mxu0 0.0
        %347 = vmatmul.mubr.f32.gmra.mrb[0].mxu0 %v253
        %v348 = vpop.f32.mrb[0].mxu0
        %v349 = vadd.f32 %v216, %v348
        %v350 = vpop.f32.mrb[0].mxu0
        %351 = vmatprep.mubr.f32.mxu0 0.0
        %352 = vmatmul.mubr.f32.gmra.mrb[0].mxu0 %v256
        %v353 = vpop.f32.mrb[0].mxu0
        %v354 = vadd.f32 %v221, %v353
        %v355 = vpop.f32.mrb[0].mxu0
        %356 = vmatprep.mubr.f32.mxu0 0.0
        %357 = vmatmul.mubr.f32.gmra.mrb[0].mxu0 %v259
        %v358 = vpop.f32.mrb[0].mxu0
        %v359 = vadd.f32 %v226, %v358
        %v360 = vpop.f32.mrb[0].mxu0
        %361 = vmatprep.mubr.f32.mxu0 0.0
        %362 = vmatmul.mubr.f32.gmra.mrb[0].mxu0 %v262
        %v363 = vpop.f32.mrb[0].mxu0
        %v364 = vadd.f32 %v231, %v363
        %v365 = vpop.f32.mrb[0].mxu0
        %366 = vmatprep.mubr.f32.mxu0 0.0
        %367 = vmatmul.mubr.f32.gmra.mrb[0].mxu0 %v265
        %v368 = vpop.f32.mrb[0].mxu0
        %v369 = vadd.f32 %v236, %v368
        %v370 = vpop.f32.mrb[0].mxu0
        %371 = vmatprep.mubr.f32.mxu0 0.0
        %372 = vmatmul.mubr.f32.gmra.mrb[0].mxu0 %v268
        %v373 = vpop.f32.mrb[0].mxu0
        %v374 = vadd.f32 %v241, %v373
        %v375 = vpop.f32.mrb[0].mxu0
        %376 = vmatprep.mubr.f32.mxu0 0.0
        %377 = vmatmul.mubr.f32.gmra.mrb[0].mxu0 %v271
        %v378 = vpop.f32.mrb[0].mxu0
        %v379 = vadd.f32 %v246, %v378
        %v380 = vpop.f32.mrb[0].mxu0
        %381 = vdwg.mxu0
        %382 = vst [vmem:[%s183] sm:$0xff] %v344
        %383 = vst [vmem:[%s183 + $0x8] sm:$0xff] %v349
        %384 = vst [vmem:[%s183 + $0x10] sm:$0xff] %v354
        %385 = vst [vmem:[%s183 + $0x18] sm:$0xff] %v359
        %386 = vst [vmem:[%s183 + $0x20] sm:$0xff] %v364
        %387 = vst [vmem:[%s183 + $0x28] sm:$0xff] %v369
        %388 = vst [vmem:[%s183 + $0x30] sm:$0xff] %v374
        %389 = vst [vmem:[%s183 + $0x38] sm:$0xff] %v379
        %s390 = sand.u32 %s109, 1
        %s391 = scalar_lea.sflag [#allocation3], %s390
        %s392 = sand.u32 %s109, 1
        %s393 = smul.addr %s392, 64
        %s394 = scalar_lea.vmem [#allocation2], %s393
        // Predicated region
        $region33: #{tpu_custom_call.1} parent=31 // pred_check
          %p395 = pneg %p119
        $region34: #{tpu_custom_call.1} parent=31 // pred_check_branch
          %397 = sbr.rel (%p395) target = $region36
        $region35: #{tpu_custom_call.1} parent=31 // pred_region
          %s399 = ssub.s32 1024, 1024
          %400 = vsyncadd %s391, %s399
          %s401 = smul.addr %s21, 8
          %s402 = sadd.s32 %s22, %s401
          %s403 = smul.addr %s402, 128
          %s404 = scalar_lea.hbm %s3, %s403
          %s405 = sshll.u32 %s394, 4
          %s406 = int_to_ptr.vmem [resolvable:$true] %s405
          %411 = dma.vmem_to_hbm [thread:$0]  %s406, 1024, %s404, %s391, 128, 128, 8
        $region36: #{tpu_custom_call.1} parent=31 // pred_fallthru
          _
      $region32: #{tpu_custom_call.1} parent=5 // pred_fallthru
        _
      %p412 = scmp.le.s32.totalorder 2, %s12
      // Predicated region
      $region37: #{tpu_custom_call.1} parent=5 // pred_check
        %p413 = pneg %p412
      $region38: #{tpu_custom_call.1} parent=5 // pred_check_branch
        %415 = sbr.rel (%p413) target = $region40
      $region39: #{tpu_custom_call.1} parent=5 // pred_region
        %s416 = ssub.s32 %s12, 2
        // Predicated region
        $region41: #{tpu_custom_call.1} parent=39 // pred_check
          %p417 = pneg %p125
        $region42: #{tpu_custom_call.1} parent=39 // pred_check_branch
          %419 = sbr.rel (%p417) target = $region44
        $region43: #{tpu_custom_call.1} parent=39 // pred_region
          %s420 = sand.u32 %s110, 1
          %s421 = scalar_lea.sflag [#allocation3], %s420
          %s422 = sand.u32 %s110, 1
          %s423 = smul.addr %s422, 64
          %s424 = scalar_lea.vmem [#allocation2], %s423
          %425 = dma.done %s421, 1024
        $region44: #{tpu_custom_call.1} parent=39 // pred_fallthru
          _
      $region40: #{tpu_custom_call.1} parent=5 // pred_fallthru
        _
    $region6: #{tpu_custom_call.1} parent=1 // loop_footer
      %s16 = sadd.s32 1, %s12
    $region7: #{tpu_custom_call.1} parent=1 // loop_footer_branch
      %11 = sbr.rel target = $region3
    $region8: #{tpu_custom_call.1} parent=1 // loop_exit
      _
    %426 = vsyncpa [#allocation3], 1
    %s427 = scalar_lea.sflag [#allocation3], 1
    %428 = vsyncpa %s427, 1

</llo_original>
